<compile_context>
chip_gen: v7x
topology: tpu7x:2x2x1
jax: 0.10.0
libtpu: 0.0.40
codegen_flags: <defaults>
</compile_context>

<pallas_src>
import functools

import jax
import jax.numpy as jnp
import numpy as np
from jax import lax
from jax.experimental import pallas as pl
from jax.experimental.pallas import tpu as pltpu


# Each relaxed gate is affine in (1, a, b, a*b):
#   gate_k(a, b) = C[k,0] + C[k,1]*a + C[k,2]*b + C[k,3]*a*b
# Same gate order as difflogic's bin_op.
_GATE_COEFFS = np.array(
    [
        [0.0,  0.0,  0.0,  0.0],   # 0  false
        [0.0,  0.0,  0.0,  1.0],   # 1  a AND b
        [0.0,  1.0,  0.0, -1.0],   # 2  a AND NOT b
        [0.0,  1.0,  0.0,  0.0],   # 3  a
        [0.0,  0.0,  1.0, -1.0],   # 4  NOT a AND b
        [0.0,  0.0,  1.0,  0.0],   # 5  b
        [0.0,  1.0,  1.0, -2.0],   # 6  XOR
        [0.0,  1.0,  1.0, -1.0],   # 7  OR
        [1.0, -1.0, -1.0,  1.0],   # 8  NOR
        [1.0, -1.0, -1.0,  2.0],   # 9  XNOR
        [1.0,  0.0, -1.0,  0.0],   # 10 NOT b
        [1.0,  0.0, -1.0,  1.0],   # 11 b -> a
        [1.0, -1.0,  0.0,  0.0],   # 12 NOT a
        [1.0, -1.0,  0.0,  1.0],   # 13 a -> b
        [1.0,  0.0,  0.0, -1.0],   # 14 NAND
        [1.0,  0.0,  0.0,  0.0],   # 15 true
    ],
    dtype=np.float32,
)


def _logic_layer_kernel(x_ref, idx_ref, c_ref, o_ref, *, kc, n_k):
    """Fused gather + gate mix.

    x_ref   : [tb, Kp]  f32   batch tile of the full (padded) input
    idx_ref : [8,  to]  int32 row 0 = idx_a, row 1 = idx_b (global column ids)
    c_ref   : [8,  to]  f32   rows 0..3 = affine gate coefficients c0..c3
    o_ref   : [tb, to]  f32
    """
    to = o_ref.shape[1]

    idx_a = idx_ref[0:1, :]                                    # [1, to]
    idx_b = idx_ref[1:2, :]
    base_rows = lax.broadcasted_iota(jnp.int32, (kc, to), 0)   # hoisted once

    a = None
    b = None
    # Static unroll over in_dim chunks (n_k = ceil(in_dim / 512), shape-static).
    for k in range(n_k):
        start = k * kc                                         # python int -> static slice
        xk = x_ref[:, start:start + kc]                        # [tb, kc]
        rows = base_rows + start if start else base_rows
        oh_a = (rows == idx_a).astype(jnp.float32)             # [kc, to] one-hot
        oh_b = (rows == idx_b).astype(jnp.float32)
        # One-hot selection on the (otherwise idle) MXU. HIGHEST precision keeps
        # full f32 mantissas, so the selection is bit-exact.
        pa = jnp.dot(xk, oh_a, preferred_element_type=jnp.float32,
                     precision=lax.Precision.HIGHEST)
        pb = jnp.dot(xk, oh_b, preferred_element_type=jnp.float32,
                     precision=lax.Precision.HIGHEST)
        a = pa if a is None else a + pa
        b = pb if b is None else b + pb

    c0 = c_ref[0:1, :]          # [1, to] — cheap sublane broadcast over batch
    c1 = c_ref[1:2, :]
    c2 = c_ref[2:3, :]
    c3 = c_ref[3:4, :]
    # 6 VALU ops / element: c0 + a*(c1 + c3*b) + c2*b
    o_ref[...] = c0 + a * (c1 + c3 * b) + c2 * b


def _round_up(n, m):
    return ((n + m - 1) // m) * m


@functools.partial(jax.jit, static_argnames=("training", "block_b", "block_o"))
def logic_layer_forward(x, idx_a, idx_b, weights, *, training=True,
                        block_b=512, block_o=1024):
    """Forward pass of LogicLayer.

    x       : [B, in_dim]   float
    idx_a/b : [out_dim]     int connection indices
    weights : [out_dim, 16] float gate logits
    training: True -> soft gates (softmax), False -> hard gates (argmax)
    returns : [B, out_dim]  float32
    """
    B, in_dim = x.shape
    out_dim = weights.shape[0]
    x = x.astype(jnp.float32)

    # ---- collapse the 16 relaxed gates into 4 affine coefficients ----------
    gate_c = jnp.asarray(_GATE_COEFFS)                          # [16, 4]
    w = weights.astype(jnp.float32)
    if training:
        probs = jax.nn.softmax(w, axis=-1)                      # [O, 16]
        coeffs = jnp.sum(probs[:, :, None] * gate_c[None, :, :], axis=1)  # [O,4]
    else:
        coeffs = gate_c[jnp.argmax(w, axis=-1)]                 # hard gates
    coeff_slab = jnp.zeros((8, out_dim), jnp.float32).at[:4, :].set(coeffs.T)

    # Lane-dense int32 index slab (rows 0/1 = idx_a/idx_b).
    idx_slab = (jnp.zeros((8, out_dim), jnp.int32)
                .at[0, :].set(idx_a.astype(jnp.int32))
                .at[1, :].set(idx_b.astype(jnp.int32)))

    # ---- in_dim chunking for the in-kernel one-hot gather matmul -----------
    KC_MAX = 512
    if in_dim <= KC_MAX:
        Kp, kc = in_dim, in_dim
    else:
        Kp, kc = _round_up(in_dim, KC_MAX), KC_MAX
    n_k = max(1, Kp // kc)
    if Kp != in_dim:
        # Small [B, in_dim]-sized pad (zeros are never selected by any index).
        x = jnp.pad(x, ((0, 0), (0, Kp - in_dim)))

    # ---- (8,128)-aligned tiles, VMEM-bounded --------------------------------
    tb = min(_round_up(block_b, 8), _round_up(B, 8))
    # Keep the double-buffered x tile under ~8 MiB even for large in_dim.
    max_tb = max(8, ((8 * 1024 * 1024) // (2 * Kp * 4)) // 8 * 8)
    tb = max(8, min(tb, max_tb))
    to = min(_round_up(block_o, 128), _round_up(out_dim, 128))

    # No padding / slicing of [B, out_dim]-sized data: ragged boundary blocks
    # are handled by Pallas (OOB writes dropped, OOB reads affect only dropped
    # rows/columns in this column-independent kernel).
    grid = (pl.cdiv(B, tb), pl.cdiv(out_dim, to))

    kernel = functools.partial(_logic_layer_kernel, kc=kc, n_k=n_k)

    out = pl.pallas_call(
        kernel,
        out_shape=jax.ShapeDtypeStruct((B, out_dim), jnp.float32),
        grid_spec=pltpu.PrefetchScalarGridSpec(
            num_scalar_prefetch=0,
            grid=grid,
            in_specs=[
                # x tile: constant block index across the inner (out_dim) axis
                # -> fetched once per batch tile, stays VMEM-resident.
                pl.BlockSpec((tb, Kp), lambda i, j: (i, 0)),
                pl.BlockSpec((8, to), lambda i, j: (0, j)),   # index slab
                pl.BlockSpec((8, to), lambda i, j: (0, j)),   # coefficient slab
            ],
            out_specs=pl.BlockSpec((tb, to), lambda i, j: (i, j)),
        ),
        compiler_params=pltpu.CompilerParams(
            dimension_semantics=("parallel", "parallel"),
            vmem_limit_bytes=48 * 1024 * 1024,   # safe on v7x (64 MiB physical)
        ),
    )(x, idx_slab, coeff_slab)

    return out


# ----------------------------- references --------------------------------- #

def _ops_stack(a, b):
    ab = a * b
    one = jnp.ones_like(a)
    zero = jnp.zeros_like(a)
    return [
        zero, ab, a - ab, a, b - ab, b, a + b - 2.0 * ab, a + b - ab,
        one - (a + b - ab), one - (a + b - 2.0 * ab), one - b, one - b + ab,
        one - a, one - a + ab, one - ab, one,
    ]


def _reference_forward_train(x, idx_a, idx_b, weights):
    a = x[:, idx_a]
    b = x[:, idx_b]
    probs = jax.nn.softmax(weights, axis=-1)               # [O, 16]
    ops = _ops_stack(a, b)
    out = jnp.zeros_like(a)
    for k in range(16):
        out = out + probs[:, k][None, :] * ops[k]
    return out


def _reference_forward_eval(x, idx_a, idx_b, weights):
    a = x[:, idx_a]
    b = x[:, idx_b]
    gate = jnp.argmax(weights, axis=-1)                    # [O]
    ops = jnp.stack(_ops_stack(a, b), axis=-1)             # [B, O, 16]
    return jnp.take_along_axis(ops, gate[None, :, None], axis=-1)[..., 0]


# ------------------------------- demo -------------------------------------- #

if __name__ == "__main__":
    def make_case(key, B, in_dim, out_dim):
        kx, kw, kp1, kp2 = jax.random.split(key, 4)
        weights = jax.random.normal(kw, (out_dim, 16), dtype=jnp.float32)
        # Deterministic 'random' connections (mirrors _get_connections logic).
        perm1 = jax.random.permutation(kp1, 2 * out_dim) % in_dim
        perm2 = jax.random.permutation(kp2, in_dim)
        indices = perm2[perm1].reshape(2, out_dim).astype(jnp.int32)
        x = jax.random.uniform(kx, (B, in_dim), dtype=jnp.float32)
        return x, indices[0], indices[1], weights

    key = jax.random.PRNGKey(0)
    k1, k2, k3 = jax.random.split(key, 3)

    # Case 1: aligned shapes; small blocks so a (2, 2) grid is exercised.
    x, ia, ib, w = make_case(k1, B=16, in_dim=64, out_dim=256)
    out = jax.block_until_ready(
        logic_layer_forward(x, ia, ib, w, training=True, block_b=8, block_o=128))
    ref = _reference_forward_train(x, ia, ib, w)
    np.testing.assert_allclose(np.asarray(out), np.asarray(ref), rtol=1e-5, atol=1e-5)

    out_e = jax.block_until_ready(
        logic_layer_forward(x, ia, ib, w, training=False, block_b=8, block_o=128))
    ref_e = _reference_forward_eval(x, ia, ib, w)
    np.testing.assert_allclose(np.asarray(out_e), np.asarray(ref_e), rtol=1e-5, atol=1e-5)

    # Case 2: unaligned shapes (ragged boundary blocks, no padding/slicing).
    x, ia, ib, w = make_case(k2, B=13, in_dim=50, out_dim=200)
    out = jax.block_until_ready(
        logic_layer_forward(x, ia, ib, w, training=True, block_b=8, block_o=128))
    ref = _reference_forward_train(x, ia, ib, w)
    np.testing.assert_allclose(np.asarray(out), np.asarray(ref), rtol=1e-5, atol=1e-5)

    # Case 3: in_dim > 512 exercises the chunked one-hot contraction.
    x, ia, ib, w = make_case(k3, B=8, in_dim=600, out_dim=128)
    out = jax.block_until_ready(logic_layer_forward(x, ia, ib, w, training=True))
    ref = _reference_forward_train(x, ia, ib, w)
    np.testing.assert_allclose(np.asarray(out), np.asarray(ref), rtol=1e-5, atol=1e-5)

    print("KERNEL_OK")
</pallas_src>

<mosaic_0001>
module attributes {stable_mosaic.version = 11 : i64} {
  func.func @_logic_layer_kernel(%arg0: i32, %arg1: i32, %arg2: memref<8x64xf32, #tpu.memory_space<vmem>>, %arg3: memref<8x128xi32, #tpu.memory_space<vmem>>, %arg4: memref<8x128xf32, #tpu.memory_space<vmem>>, %arg5: memref<8x128xf32, #tpu.memory_space<vmem>>) attributes {dimension_semantics = [#tpu.dimension_semantics<parallel>, #tpu.dimension_semantics<parallel>], iteration_bounds = array<i64: 2, 2>, scalar_prefetch = 0 : i64, scratch_operands = 0 : i64, tpu.core_type = #tpu.core_type<tc>, window_params = [{transform_indices = @transform_0, window_bounds = array<i64: 8, 64>}, {transform_indices = @transform_1, window_bounds = array<i64: 8, 128>}, {transform_indices = @transform_2, window_bounds = array<i64: 8, 128>}, {transform_indices = @transform_3, window_bounds = array<i64: 8, 128>}]} {
    %c0 = arith.constant 0 : index
    %c0_0 = arith.constant 0 : index
    %0 = vector.load %arg3[%c0, %c0_0] : memref<8x128xi32, #tpu.memory_space<vmem>>, vector<1x128xi32>
    %c1 = arith.constant 1 : index
    %c0_1 = arith.constant 0 : index
    %1 = vector.load %arg3[%c1, %c0_1] : memref<8x128xi32, #tpu.memory_space<vmem>>, vector<1x128xi32>
    %2 = tpu.iota {dimensions = array<i32: 0>} : vector<64x128xi32>
    %c0_2 = arith.constant 0 : index
    %c0_3 = arith.constant 0 : index
    %3 = vector.load %arg2[%c0_2, %c0_3] : memref<8x64xf32, #tpu.memory_space<vmem>>, vector<8x64xf32>
    %4 = vector.broadcast %0 : vector<1x128xi32> to vector<64x128xi32>
    %5 = arith.cmpi eq, %2, %4 : vector<64x128xi32>
    %6 = arith.extui %5 : vector<64x128xi1> to vector<64x128xi32>
    %7 = arith.sitofp %6 : vector<64x128xi32> to vector<64x128xf32>
    %8 = vector.broadcast %1 : vector<1x128xi32> to vector<64x128xi32>
    %9 = arith.cmpi eq, %2, %8 : vector<64x128xi32>
    %10 = arith.extui %9 : vector<64x128xi1> to vector<64x128xi32>
    %11 = arith.sitofp %10 : vector<64x128xi32> to vector<64x128xf32>
    %cst = arith.constant dense<0.000000e+00> : vector<8x128xf32>
    %12 = tpu.matmul %3, %7, %cst {dimension_numbers = #tpu.dot_dimension_numbers<[1], [0], [0], [1], [0, 0, 1, 1], [], []>, precision = #tpu.contract_precision<fp32>} : vector<8x64xf32>, vector<64x128xf32>, vector<8x128xf32> -> vector<8x128xf32>
    %cst_4 = arith.constant dense<0.000000e+00> : vector<8x128xf32>
    %13 = tpu.matmul %3, %11, %cst_4 {dimension_numbers = #tpu.dot_dimension_numbers<[1], [0], [0], [1], [0, 0, 1, 1], [], []>, precision = #tpu.contract_precision<fp32>} : vector<8x64xf32>, vector<64x128xf32>, vector<8x128xf32> -> vector<8x128xf32>
    %c0_5 = arith.constant 0 : index
    %c0_6 = arith.constant 0 : index
    %14 = vector.load %arg4[%c0_5, %c0_6] : memref<8x128xf32, #tpu.memory_space<vmem>>, vector<1x128xf32>
    %c1_7 = arith.constant 1 : index
    %c0_8 = arith.constant 0 : index
    %15 = vector.load %arg4[%c1_7, %c0_8] : memref<8x128xf32, #tpu.memory_space<vmem>>, vector<1x128xf32>
    %c2 = arith.constant 2 : index
    %c0_9 = arith.constant 0 : index
    %16 = vector.load %arg4[%c2, %c0_9] : memref<8x128xf32, #tpu.memory_space<vmem>>, vector<1x128xf32>
    %c3 = arith.constant 3 : index
    %c0_10 = arith.constant 0 : index
    %17 = vector.load %arg4[%c3, %c0_10] : memref<8x128xf32, #tpu.memory_space<vmem>>, vector<1x128xf32>
    %18 = vector.broadcast %17 : vector<1x128xf32> to vector<8x128xf32>
    %19 = arith.mulf %18, %13 : vector<8x128xf32>
    %20 = vector.broadcast %15 : vector<1x128xf32> to vector<8x128xf32>
    %21 = arith.addf %20, %19 : vector<8x128xf32>
    %22 = arith.mulf %12, %21 : vector<8x128xf32>
    %23 = vector.broadcast %14 : vector<1x128xf32> to vector<8x128xf32>
    %24 = arith.addf %23, %22 : vector<8x128xf32>
    %25 = vector.broadcast %16 : vector<1x128xf32> to vector<8x128xf32>
    %26 = arith.mulf %25, %13 : vector<8x128xf32>
    %27 = arith.addf %24, %26 : vector<8x128xf32>
    %c0_11 = arith.constant 0 : index
    %c0_12 = arith.constant 0 : index
    %28 = vector.load %arg5[%c0_11, %c0_12] : memref<8x128xf32, #tpu.memory_space<vmem>>, vector<8x128xf32>
    tpu.vector_store %arg5[%c0_11, %c0_12], %27 {strides = array<i32>} : memref<8x128xf32, #tpu.memory_space<vmem>>, vector<8x128xf32>,
    return
  }
  func.func @transform_0(%arg0: i32, %arg1: i32) -> (i32, i32) {
    %c0_i32 = arith.constant 0 : i32
    %c0_i32_0 = arith.constant 0 : i32
    return %arg0, %c0_i32 : i32, i32
  }
  func.func @transform_1(%arg0: i32, %arg1: i32) -> (i32, i32) {
    %c0_i32 = arith.constant 0 : i32
    %c0_i32_0 = arith.constant 0 : i32
    return %c0_i32, %arg1 : i32, i32
  }
  func.func @transform_2(%arg0: i32, %arg1: i32) -> (i32, i32) {
    %c0_i32 = arith.constant 0 : i32
    %c0_i32_0 = arith.constant 0 : i32
    return %c0_i32, %arg1 : i32, i32
  }
  func.func @transform_3(%arg0: i32, %arg1: i32) -> (i32, i32) {
    %c0_i32 = arith.constant 0 : i32
    return %arg0, %arg1 : i32, i32
  }
}

</mosaic_0001>

<llo_original>
// kernel: logic_layer_forward.1
$region0: #{logic_layer_forward.1}
  #allocation0 [shape = 'u32[]', space=smem, size = 0x4, offset = 0x4, fixed_abs, tag = 'smem constant byte address 0x4 - core index']
  #allocation1 [shape = 'u32[144,128]{1,0:T(1,128)}', space=vmem, size = 0x12000, scoped, tag = 'internal scratch']
  %s0 = inlined_call_operand.vmem [shape: f32[16,64], index: 0, kind: input, shape index: {}]
  %s1 = inlined_call_operand.vmem [shape: s32[8,256], index: 1, kind: input, shape index: {}]
  %s2 = inlined_call_operand.vmem [shape: f32[8,256], index: 2, kind: input, shape index: {}]
  %s3 = inlined_call_operand.hbm [shape: f32[16,256], index: 3, kind: output, shape index: {}]
  %s4 = sld [smem:[#allocation0]]
  $region45: #{logic_layer_forward.1} parent=0
    _
  %s6 = ssub.s32 1, %s4
  %s7 = scalar_select 0, %s6, %s4
  $region1: #{logic_layer_forward.1} parent=0
    #allocation2 [shape = 'u8[8192]{0}', space=vmem, size = 0x2000, scoped, tag = 'output window, operand 0']
    #allocation3 [shape = 's32[2]{0}', space=sflag, size = 0x8, scoped, tag = 'scoped memory for logic_layer_forward.1']
    %8 = vsyncpa [#allocation3], 0
    %s9 = scalar_lea.sflag [#allocation3], 1
    %10 = vsyncpa %s9, 0
    loop: start=0, step=1, limit=6
    $region2: #{logic_layer_forward.1} parent=1 // loop_pre_header
      _
    $region3: #{logic_layer_forward.1} parent=1 // loop_header
      %s12 = sphi 0, %s16
      %p13 = scmp.ge.s32.totalorder %s12, 6
      %s19 = sphi 0, %s31
      %s20 = sphi 0, %s27
      %s21 = sphi 0, %s19
      %s22 = sphi 0, %s20
      %s23 = sphi 0, %s21
      %s24 = sphi 0, %s22
      %s34 = sphi 0, %s36
      %s37 = sphi 0, %s34
      %s38 = sphi 0, %s37
      %s54 = sphi 0, %s38
      %s60 = sphi 0, %s62
      %s63 = sphi 0, %s60
      %s64 = sphi 0, %s63
      %s80 = sphi 0, %s64
      %s86 = sphi 0, %s88
      %s89 = sphi 0, %s86
      %s90 = sphi 0, %s89
      %s106 = sphi 0, %s90
      %s114 = sphi 0, %s116
      %s117 = sphi 0, %s114
      %s118 = sphi 0, %s117
      %s134 = sphi 0, %s118
    $region4: #{logic_layer_forward.1} parent=1 // loop_header_branch
      %15 = sbr.rel (%p13) target = $region8
    $region5: #{logic_layer_forward.1} parent=1 // loop_body
      %s17 = ssub.s32 %s12, 1
      %s18 = ssub.s32 %s12, 2
      %s25 = sadd.s32 1, %s20
      %p26 = scmp.ge.s32.totalorder %s25, 2
      %s27 = scalar_select %p26, 0, %s25
      %s28 = sadd.s32 1, %s19
      %s29 = scalar_select %p26, %s28, %s19
      %p30 = scmp.ge.s32.totalorder %s29, 2
      %s31 = scalar_select %p30, 0, %s29
      %s32 = ssub.s32 %s19, %s31
      %p33 = scmp.eq.s32.totalorder %s32, 0
      %s35 = sadd.s32 %s34, 1
      %s36 = scalar_select %p33, %s34, %s35
      %p39 = pneg %p33
      %p40 = scmp.eq.s32.totalorder %s12, 3
      %p41 = por %p39, %p40
      %p42 = scmp.ne.s32.totalorder %s34, %s37
      %p43 = scmp.eq.s32.totalorder %s12, 0
      %p44 = por %p42, %p43
      %p45 = scmp.ne.s32.totalorder %s34, %s37
      %p46 = scmp.eq.s32.totalorder %s17, 3
      %p47 = por %p45, %p46
      %p48 = scmp.ne.s32.totalorder %s37, %s38
      %p49 = scmp.eq.s32.totalorder %s17, 0
      %p50 = por %p48, %p49
      %p51 = scmp.ne.s32.totalorder %s37, %s38
      %p52 = scmp.eq.s32.totalorder %s18, 3
      %p53 = por %p51, %p52
      %p55 = scmp.ne.s32.totalorder %s38, %s54
      %p56 = scmp.eq.s32.totalorder %s18, 0
      %p57 = por %p55, %p56
      %s58 = ssub.s32 %s20, %s27
      %p59 = scmp.eq.s32.totalorder %s58, 0
      %s61 = sadd.s32 %s60, 1
      %s62 = scalar_select %p59, %s60, %s61
      %p65 = pneg %p59
      %p66 = scmp.eq.s32.totalorder %s12, 3
      %p67 = por %p65, %p66
      %p68 = scmp.ne.s32.totalorder %s60, %s63
      %p69 = scmp.eq.s32.totalorder %s12, 0
      %p70 = por %p68, %p69
      %p71 = scmp.ne.s32.totalorder %s60, %s63
      %p72 = scmp.eq.s32.totalorder %s17, 3
      %p73 = por %p71, %p72
      %p74 = scmp.ne.s32.totalorder %s63, %s64
      %p75 = scmp.eq.s32.totalorder %s17, 0
      %p76 = por %p74, %p75
      %p77 = scmp.ne.s32.totalorder %s63, %s64
      %p78 = scmp.eq.s32.totalorder %s18, 3
      %p79 = por %p77, %p78
      %p81 = scmp.ne.s32.totalorder %s64, %s80
      %p82 = scmp.eq.s32.totalorder %s18, 0
      %p83 = por %p81, %p82
      %s84 = ssub.s32 %s20, %s27
      %p85 = scmp.eq.s32.totalorder %s84, 0
      %s87 = sadd.s32 %s86, 1
      %s88 = scalar_select %p85, %s86, %s87
      %p91 = pneg %p85
      %p92 = scmp.eq.s32.totalorder %s12, 3
      %p93 = por %p91, %p92
      %p94 = scmp.ne.s32.totalorder %s86, %s89
      %p95 = scmp.eq.s32.totalorder %s12, 0
      %p96 = por %p94, %p95
      %p97 = scmp.ne.s32.totalorder %s86, %s89
      %p98 = scmp.eq.s32.totalorder %s17, 3
      %p99 = por %p97, %p98
      %p100 = scmp.ne.s32.totalorder %s89, %s90
      %p101 = scmp.eq.s32.totalorder %s17, 0
      %p102 = por %p100, %p101
      %p103 = scmp.ne.s32.totalorder %s89, %s90
      %p104 = scmp.eq.s32.totalorder %s18, 3
      %p105 = por %p103, %p104
      %p107 = scmp.ne.s32.totalorder %s90, %s106
      %p108 = scmp.eq.s32.totalorder %s18, 0
      %p109 = por %p107, %p108
      %s110 = ssub.s32 %s19, %s31
      %s111 = ssub.s32 %s20, %s27
      %s112 = sor.u32 %s110, %s111
      %p113 = scmp.eq.s32.totalorder %s112, 0
      %s115 = sadd.s32 %s114, 1
      %s116 = scalar_select %p113, %s114, %s115
      %p119 = pneg %p113
      %p120 = scmp.eq.s32.totalorder %s12, 3
      %p121 = por %p119, %p120
      %p122 = scmp.ne.s32.totalorder %s114, %s117
      %p123 = scmp.eq.s32.totalorder %s12, 0
      %p124 = por %p122, %p123
      %p125 = scmp.ne.s32.totalorder %s114, %s117
      %p126 = scmp.eq.s32.totalorder %s17, 3
      %p127 = por %p125, %p126
      %p128 = scmp.ne.s32.totalorder %s117, %s118
      %p129 = scmp.eq.s32.totalorder %s17, 0
      %p130 = por %p128, %p129
      %p131 = scmp.ne.s32.totalorder %s117, %s118
      %p132 = scmp.eq.s32.totalorder %s18, 3
      %p133 = por %p131, %p132
      %p135 = scmp.ne.s32.totalorder %s118, %s134
      %p136 = scmp.eq.s32.totalorder %s18, 0
      %p137 = por %p135, %p136
      %p138 = scmp.le.s32.totalorder 1, %s12
      %p139 = scmp.lt.s32.totalorder %s12, 5
      %p140 = pnand %p138, %p139
      %p141 = pneg %p140
      // Predicated region
      $region9: #{logic_layer_forward.1} parent=5 // pred_check
        _
      $region10: #{logic_layer_forward.1} parent=5 // pred_check_branch
        %143 = sbr.rel (%p140) target = $region12
      $region11: #{logic_layer_forward.1} parent=5 // pred_region
        %s144 = ssub.s32 %s12, 1
      $region12: #{logic_layer_forward.1} parent=5 // pred_fallthru
        _
      %p145 = scmp.lt.s32.totalorder %s12, 4
      // Predicated region
      $region13: #{logic_layer_forward.1} parent=5 // pred_check
        %p146 = pneg %p145
      $region14: #{logic_layer_forward.1} parent=5 // pred_check_branch
        %148 = sbr.rel (%p146) target = $region16
      $region15: #{logic_layer_forward.1} parent=5 // pred_region
        // Predicated region
        $region17: #{logic_layer_forward.1} parent=15 // pred_check
          %p149 = pneg %p44
        $region18: #{logic_layer_forward.1} parent=15 // pred_check_branch
          %151 = sbr.rel (%p149) target = $region20
        $region19: #{logic_layer_forward.1} parent=15 // pred_region
          %p152 = scmp.lt.s32.totalorder %s19, 1
          %s153 = scalar_select %p152, %s19, 1
          %s154 = smul.addr %s153, 8
          %s155 = scalar_lea.vmem %s0, %s154
        $region20: #{logic_layer_forward.1} parent=15 // pred_fallthru
          _
        // Predicated region
        $region21: #{logic_layer_forward.1} parent=15 // pred_check
          %p156 = pneg %p70
        $region22: #{logic_layer_forward.1} parent=15 // pred_check_branch
          %158 = sbr.rel (%p156) target = $region24
        $region23: #{logic_layer_forward.1} parent=15 // pred_region
          %p159 = scmp.lt.s32.totalorder %s20, 1
          %s160 = scalar_select %p159, %s20, 1
          %s161 = smul.addr %s160, 8
          %s162 = scalar_lea.vmem %s1, %s161
        $region24: #{logic_layer_forward.1} parent=15 // pred_fallthru
          _
        // Predicated region
        $region25: #{logic_layer_forward.1} parent=15 // pred_check
          %p163 = pneg %p96
        $region26: #{logic_layer_forward.1} parent=15 // pred_check_branch
          %165 = sbr.rel (%p163) target = $region28
        $region27: #{logic_layer_forward.1} parent=15 // pred_region
          %p166 = scmp.lt.s32.totalorder %s20, 1
          %s167 = scalar_select %p166, %s20, 1
          %s168 = smul.addr %s167, 8
          %s169 = scalar_lea.vmem %s2, %s168
        $region28: #{logic_layer_forward.1} parent=15 // pred_fallthru
          _
      $region16: #{logic_layer_forward.1} parent=5 // pred_fallthru
        _
      %p170 = scmp.le.s32.totalorder 1, %s12
      %p171 = scmp.lt.s32.totalorder %s12, 5
      %p172 = pnand %p170, %p171
      %p173 = pneg %p172
      // Predicated region
      $region29: #{logic_layer_forward.1} parent=5 // pred_check
        _
      $region30: #{logic_layer_forward.1} parent=5 // pred_check_branch
        %175 = sbr.rel (%p172) target = $region32
      $region31: #{logic_layer_forward.1} parent=5 // pred_region
        %s176 = ssub.s32 %s12, 1
        %p177 = scmp.lt.s32.totalorder %s21, 1
        %s178 = scalar_select %p177, %s21, 1
        %s179 = smul.addr %s178, 8
        %s180 = scalar_lea.vmem %s0, %s179
        %p181 = pneg %p50
        %p182 = pneg %p47
        %p183 = scmp.lt.s32.totalorder %s22, 1
        %s184 = scalar_select %p183, %s22, 1
        %s185 = smul.addr %s184, 8
        %s186 = scalar_lea.vmem %s1, %s185
        %p187 = pneg %p76
        %p188 = pneg %p73
        %p189 = scmp.lt.s32.totalorder %s22, 1
        %s190 = scalar_select %p189, %s22, 1
        %s191 = smul.addr %s190, 8
        %s192 = scalar_lea.vmem %s2, %s191
        %p193 = pneg %p102
        %p194 = pneg %p99
        %p195 = pneg %p130
        %p196 = pneg %p127
        %s197 = sand.u32 %s117, 1
        %s198 = scalar_lea.sflag [#allocation3], %s197
        %s199 = sand.u32 %s117, 1
        %s200 = smul.addr %s199, 8
        %s201 = scalar_lea.vmem [#allocation2], %s200
        %p202 = scmp.lt.s32.totalorder %s21, 1
        %s203 = scalar_select %p202, %s21, 1
        %s204 = smul.addr %s203, 8
        %s205 = scalar_lea.vmem %s0, %s204
        %p206 = scmp.lt.s32.totalorder %s22, 1
        %s207 = scalar_select %p206, %s22, 1
        %s208 = smul.addr %s207, 8
        %s209 = scalar_lea.vmem %s1, %s208
        %p210 = scmp.lt.s32.totalorder %s22, 1
        %s211 = scalar_select %p210, %s22, 1
        %s212 = smul.addr %s211, 8
        %s213 = scalar_lea.vmem %s2, %s212
        %v214 = vld [vmem:[%s209] sm:$0x1]
        %v215 = vld [vmem:[%s209 + $0x1] sm:$0x1]
        %v216 = vlaneseq
        %v217 = vshrl.u32 %v216, 7
        %v218 = vadd.s32 %v217, 8
        %v219 = vadd.s32 %v217, 16
        %v220 = vadd.s32 %v217, 24
        %v221 = vadd.s32 %v217, 32
        %v222 = vadd.s32 %v217, 40
        %v223 = vadd.s32 %v217, 48
        %v224 = vadd.s32 %v217, 56
        %v225 = vld [vmem:[%s205] sm:$0xff]
        %v226 = vlaneseq
        %v227 = vshrl.u32 %v226, 7
        %v228 = vsub.s32 0, %v227
        %v229 = vrot.slane %v214, %v228
        %vm230 = vcmp.eq.s32.totalorder %v217, %v229
        %vm231 = vcmp.eq.s32.totalorder %v218, %v229
        %vm232 = vcmp.eq.s32.totalorder %v219, %v229
        %vm233 = vcmp.eq.s32.totalorder %v220, %v229
        %vm234 = vcmp.eq.s32.totalorder %v221, %v229
        %vm235 = vcmp.eq.s32.totalorder %v222, %v229
        %vm236 = vcmp.eq.s32.totalorder %v223, %v229
        %vm237 = vcmp.eq.s32.totalorder %v224, %v229
        %v238 = vsel %vm230, 1, 0
        %v239 = vsel %vm231, 1, 0
        %v240 = vsel %vm232, 1, 0
        %v241 = vsel %vm233, 1, 0
        %v242 = vsel %vm234, 1, 0
        %v243 = vsel %vm235, 1, 0
        %v244 = vsel %vm236, 1, 0
        %v245 = vsel %vm237, 1, 0
        %v246 = vcvt.s32.f32 %v238
        %v247 = vcvt.s32.f32 %v239
        %v248 = vcvt.s32.f32 %v240
        %v249 = vcvt.s32.f32 %v241
        %v250 = vcvt.s32.f32 %v242
        %v251 = vcvt.s32.f32 %v243
        %v252 = vcvt.s32.f32 %v244
        %v253 = vcvt.s32.f32 %v245
        %v254 = vlaneseq
        %v255 = vshrl.u32 %v254, 7
        %v256 = vsub.s32 0, %v255
        %v257 = vrot.slane %v215, %v256
        %vm258 = vcmp.eq.s32.totalorder %v217, %v257
        %vm259 = vcmp.eq.s32.totalorder %v218, %v257
        %vm260 = vcmp.eq.s32.totalorder %v219, %v257
        %vm261 = vcmp.eq.s32.totalorder %v220, %v257
        %vm262 = vcmp.eq.s32.totalorder %v221, %v257
        %vm263 = vcmp.eq.s32.totalorder %v222, %v257
        %vm264 = vcmp.eq.s32.totalorder %v223, %v257
        %vm265 = vcmp.eq.s32.totalorder %v224, %v257
        %v266 = vsel %vm258, 1, 0
        %v267 = vsel %vm259, 1, 0
        %v268 = vsel %vm260, 1, 0
        %v269 = vsel %vm261, 1, 0
        %v270 = vsel %vm262, 1, 0
        %v271 = vsel %vm263, 1, 0
        %v272 = vsel %vm264, 1, 0
        %v273 = vsel %vm265, 1, 0
        %v274 = vcvt.s32.f32 %v266
        %v275 = vcvt.s32.f32 %v267
        %v276 = vcvt.s32.f32 %v268
        %v277 = vcvt.s32.f32 %v269
        %v278 = vcvt.s32.f32 %v270
        %v279 = vcvt.s32.f32 %v271
        %v280 = vcvt.s32.f32 %v272
        %v281 = vcvt.s32.f32 %v273
        %vm282 = vcmask 523264
        %v284 = vsel %vm282, %v225, 0
        %286 = vmatprep.subr.mxu0 0.0
        %v287 = vand.u32 %v246, 4294901760
        %288 = vmatpush1.msra.mxu0 %v287
        %289 = vmatprep.subr.mxu0 0.0
        %v290 = vand.u32 %v247, 4294901760
        %291 = vmatpush1.msra.mxu0 %v290
        %292 = vmatprep.subr.mxu0 0.0
        %v293 = vand.u32 %v248, 4294901760
        %294 = vmatpush1.msra.mxu0 %v293
        %295 = vmatprep.subr.mxu0 0.0
        %v296 = vand.u32 %v249, 4294901760
        %297 = vmatpush1.msra.mxu0 %v296
        %298 = vmatprep.subr.mxu0 0.0
        %v299 = vand.u32 %v250, 4294901760
        %300 = vmatpush1.msra.mxu0 %v299
        %301 = vmatprep.subr.mxu0 0.0
        %v302 = vand.u32 %v251, 4294901760
        %303 = vmatpush1.msra.mxu0 %v302
        %304 = vmatprep.subr.mxu0 0.0
        %v305 = vand.u32 %v252, 4294901760
        %306 = vmatpush1.msra.mxu0 %v305
        %307 = vmatprep.subr.mxu0 0.0
        %v308 = vand.u32 %v253, 4294901760
        %309 = vmatpush1.msra.mxu0 %v308
        %310 = vmatprep.subr.mxu0 0.0
        %311 = vmatpush1.msra.mxu0 0.0
        %312 = vmatprep.subr.mxu0 0.0
        %313 = vmatpush1.msra.mxu0 0.0
        %314 = vmatprep.subr.mxu0 0.0
        %315 = vmatpush1.msra.mxu0 0.0
        %316 = vmatprep.subr.mxu0 0.0
        %317 = vmatpush1.msra.mxu0 0.0
        %318 = vmatprep.subr.mxu0 0.0
        %319 = vmatpush1.msra.mxu0 0.0
        %320 = vmatprep.subr.mxu0 0.0
        %321 = vmatpush1.msra.mxu0 0.0
        %322 = vmatprep.subr.mxu0 0.0
        %323 = vmatpush1.msra.mxu0 0.0
        %324 = vmatprep.subr.mxu0 0.0
        %325 = vmatpush1.msra.mxu0 0.0
        %326 = vmatprep.subr.mxu0 0.0
        %327 = vmatpush1.msra.mxu0 0.0
        %328 = vmatprep.subr.mxu0 0.0
        %329 = vmatpush1.msra.mxu0 0.0
        %330 = vmatprep.subr.mxu0 0.0
        %331 = vmatpush1.msra.mxu0 0.0
        %332 = vmatprep.subr.mxu0 0.0
        %333 = vmatpush1.msra.mxu0 0.0
        %334 = vmatprep.subr.mxu0 0.0
        %335 = vmatpush1.msra.mxu0 0.0
        %336 = vmatprep.subr.mxu0 0.0
        %337 = vmatpush1.msra.mxu0 0.0
        %338 = vmatprep.subr.mxu0 0.0
        %339 = vmatpush1.msra.mxu0 0.0
        %340 = vmatprep.subr.mxu0 0.0
        %341 = vmatpush1.msra.mxu0 0.0
        %342 = vmatprep.subr.mxu0 0.0
        %343 = vmatpush1.msra.mxu0 0.0
        %344 = vmatprep.subr.mxu0 0.0
        %345 = vmatpush1.msra.mxu0 0.0
        %346 = vmatprep.subr.mxu0 0.0
        %347 = vmatpush1.msra.mxu0 0.0
        %348 = vmatprep.subr.mxu0 0.0
        %349 = vmatpush1.msra.mxu0 0.0
        %350 = vmatprep.subr.mxu0 0.0
        %351 = vmatpush1.msra.mxu0 0.0
        %352 = vmatprep.subr.mxu0 0.0
        %353 = vmatpush1.msra.mxu0 0.0
        %354 = vmatprep.subr.mxu0 0.0
        %355 = vmatpush1.msra.mxu0 0.0
        %356 = vmatprep.subr.mxu0 0.0
        %357 = vmatpush1.msra.mxu0 0.0
        %358 = vmatprep.mubr.f32.mxu0 0.0
        %v359 = vand.u32 %v284, 4294901760
        %v360 = vsub.f32 %v284, %v359
        %v361 = vand.u32 %v360, 4294901760
        %v362 = vsub.f32 %v360, %v361
        %v363 = vand.u32 %v362, 4294901760
        %364 = vmatmul.mubr.f32.gmra.mrb[0].mxu0 %v363
        %v365 = vpop.f32.mrb[0].mxu0
        %v366 = vadd.f32 0.0, %v365
        %v367 = vpop.f32.mrb[0].mxu0
        %368 = vdwg.mxu0
        %369 = vmatprep.subr.mxu0 0.0
        %v370 = vand.u32 %v246, 4294901760
        %v371 = vsub.f32 %v246, %v370
        %v372 = vand.u32 %v371, 4294901760
        %v373 = vsub.f32 %v371, %v372
        %v374 = vand.u32 %v373, 4294901760
        %375 = vmatpush1.msra.mxu0 %v374
        %376 = vmatprep.subr.mxu0 0.0
        %v377 = vand.u32 %v247, 4294901760
        %v378 = vsub.f32 %v247, %v377
        %v379 = vand.u32 %v378, 4294901760
        %v380 = vsub.f32 %v378, %v379
        %v381 = vand.u32 %v380, 4294901760
        %382 = vmatpush1.msra.mxu0 %v381
        %383 = vmatprep.subr.mxu0 0.0
        %v384 = vand.u32 %v248, 4294901760
        %v385 = vsub.f32 %v248, %v384
        %v386 = vand.u32 %v385, 4294901760
        %v387 = vsub.f32 %v385, %v386
        %v388 = vand.u32 %v387, 4294901760
        %389 = vmatpush1.msra.mxu0 %v388
        %390 = vmatprep.subr.mxu0 0.0
        %v391 = vand.u32 %v249, 4294901760
        %v392 = vsub.f32 %v249, %v391
        %v393 = vand.u32 %v392, 4294901760
        %v394 = vsub.f32 %v392, %v393
        %v395 = vand.u32 %v394, 4294901760
        %396 = vmatpush1.msra.mxu0 %v395
        %397 = vmatprep.subr.mxu0 0.0
        %v398 = vand.u32 %v250, 4294901760
        %v399 = vsub.f32 %v250, %v398
        %v400 = vand.u32 %v399, 4294901760
        %v401 = vsub.f32 %v399, %v400
        %v402 = vand.u32 %v401, 4294901760
        %403 = vmatpush1.msra.mxu0 %v402
        %404 = vmatprep.subr.mxu0 0.0
        %v405 = vand.u32 %v251, 4294901760
        %v406 = vsub.f32 %v251, %v405
        %v407 = vand.u32 %v406, 4294901760
        %v408 = vsub.f32 %v406, %v407
        %v409 = vand.u32 %v408, 4294901760
        %410 = vmatpush1.msra.mxu0 %v409
        %411 = vmatprep.subr.mxu0 0.0
        %v412 = vand.u32 %v252, 4294901760
        %v413 = vsub.f32 %v252, %v412
        %v414 = vand.u32 %v413, 4294901760
        %v415 = vsub.f32 %v413, %v414
        %v416 = vand.u32 %v415, 4294901760
        %417 = vmatpush1.msra.mxu0 %v416
        %418 = vmatprep.subr.mxu0 0.0
        %v419 = vand.u32 %v253, 4294901760
        %v420 = vsub.f32 %v253, %v419
        %v421 = vand.u32 %v420, 4294901760
        %v422 = vsub.f32 %v420, %v421
        %v423 = vand.u32 %v422, 4294901760
        %424 = vmatpush1.msra.mxu0 %v423
        %425 = vmatprep.subr.mxu0 0.0
        %426 = vmatpush1.msra.mxu0 0.0
        %427 = vmatprep.subr.mxu0 0.0
        %428 = vmatpush1.msra.mxu0 0.0
        %429 = vmatprep.subr.mxu0 0.0
        %430 = vmatpush1.msra.mxu0 0.0
        %431 = vmatprep.subr.mxu0 0.0
        %432 = vmatpush1.msra.mxu0 0.0
        %433 = vmatprep.subr.mxu0 0.0
        %434 = vmatpush1.msra.mxu0 0.0
        %435 = vmatprep.subr.mxu0 0.0
        %436 = vmatpush1.msra.mxu0 0.0
        %437 = vmatprep.subr.mxu0 0.0
        %438 = vmatpush1.msra.mxu0 0.0
        %439 = vmatprep.subr.mxu0 0.0
        %440 = vmatpush1.msra.mxu0 0.0
        %441 = vmatprep.subr.mxu0 0.0
        %442 = vmatpush1.msra.mxu0 0.0
        %443 = vmatprep.subr.mxu0 0.0
        %444 = vmatpush1.msra.mxu0 0.0
        %445 = vmatprep.subr.mxu0 0.0
        %446 = vmatpush1.msra.mxu0 0.0
        %447 = vmatprep.subr.mxu0 0.0
        %448 = vmatpush1.msra.mxu0 0.0
        %449 = vmatprep.subr.mxu0 0.0
        %450 = vmatpush1.msra.mxu0 0.0
        %451 = vmatprep.subr.mxu0 0.0
        %452 = vmatpush1.msra.mxu0 0.0
        %453 = vmatprep.subr.mxu0 0.0
        %454 = vmatpush1.msra.mxu0 0.0
        %455 = vmatprep.subr.mxu0 0.0
        %456 = vmatpush1.msra.mxu0 0.0
        %457 = vmatprep.subr.mxu0 0.0
        %458 = vmatpush1.msra.mxu0 0.0
        %459 = vmatprep.subr.mxu0 0.0
        %460 = vmatpush1.msra.mxu0 0.0
        %461 = vmatprep.subr.mxu0 0.0
        %462 = vmatpush1.msra.mxu0 0.0
        %463 = vmatprep.subr.mxu0 0.0
        %464 = vmatpush1.msra.mxu0 0.0
        %465 = vmatprep.subr.mxu0 0.0
        %466 = vmatpush1.msra.mxu0 0.0
        %467 = vmatprep.subr.mxu0 0.0
        %468 = vmatpush1.msra.mxu0 0.0
        %469 = vmatprep.subr.mxu0 0.0
        %470 = vmatpush1.msra.mxu0 0.0
        %471 = vmatprep.subr.mxu0 0.0
        %472 = vmatpush1.msra.mxu0 0.0
        %473 = vmatprep.mubr.f32.mxu0 0.0
        %v474 = vand.u32 %v284, 4294901760
        %475 = vmatmul.mubr.f32.gmra.mrb[0].mxu0 %v474
        %v476 = vpop.f32.mrb[0].mxu0
        %v477 = vadd.f32 %v366, %v476
        %v478 = vpop.f32.mrb[0].mxu0
        %479 = vdwg.mxu0
        %480 = vmatprep.subr.mxu0 0.0
        %v481 = vand.u32 %v246, 4294901760
        %v482 = vsub.f32 %v246, %v481
        %483 = vmatpush1.msra.mxu0 %v482
        %484 = vmatprep.subr.mxu0 0.0
        %v485 = vand.u32 %v247, 4294901760
        %v486 = vsub.f32 %v247, %v485
        %487 = vmatpush1.msra.mxu0 %v486
        %488 = vmatprep.subr.mxu0 0.0
        %v489 = vand.u32 %v248, 4294901760
        %v490 = vsub.f32 %v248, %v489
        %491 = vmatpush1.msra.mxu0 %v490
        %492 = vmatprep.subr.mxu0 0.0
        %v493 = vand.u32 %v249, 4294901760
        %v494 = vsub.f32 %v249, %v493
        %495 = vmatpush1.msra.mxu0 %v494
        %496 = vmatprep.subr.mxu0 0.0
        %v497 = vand.u32 %v250, 4294901760
        %v498 = vsub.f32 %v250, %v497
        %499 = vmatpush1.msra.mxu0 %v498
        %500 = vmatprep.subr.mxu0 0.0
        %v501 = vand.u32 %v251, 4294901760
        %v502 = vsub.f32 %v251, %v501
        %503 = vmatpush1.msra.mxu0 %v502
        %504 = vmatprep.subr.mxu0 0.0
        %v505 = vand.u32 %v252, 4294901760
        %v506 = vsub.f32 %v252, %v505
        %507 = vmatpush1.msra.mxu0 %v506
        %508 = vmatprep.subr.mxu0 0.0
        %v509 = vand.u32 %v253, 4294901760
        %v510 = vsub.f32 %v253, %v509
        %511 = vmatpush1.msra.mxu0 %v510
        %512 = vmatprep.subr.mxu0 0.0
        %513 = vmatpush1.msra.mxu0 0.0
        %514 = vmatprep.subr.mxu0 0.0
        %515 = vmatpush1.msra.mxu0 0.0
        %516 = vmatprep.subr.mxu0 0.0
        %517 = vmatpush1.msra.mxu0 0.0
        %518 = vmatprep.subr.mxu0 0.0
        %519 = vmatpush1.msra.mxu0 0.0
        %520 = vmatprep.subr.mxu0 0.0
        %521 = vmatpush1.msra.mxu0 0.0
        %522 = vmatprep.subr.mxu0 0.0
        %523 = vmatpush1.msra.mxu0 0.0
        %524 = vmatprep.subr.mxu0 0.0
        %525 = vmatpush1.msra.mxu0 0.0
        %526 = vmatprep.subr.mxu0 0.0
        %527 = vmatpush1.msra.mxu0 0.0
        %528 = vmatprep.subr.mxu0 0.0
        %529 = vmatpush1.msra.mxu0 0.0
        %530 = vmatprep.subr.mxu0 0.0
        %531 = vmatpush1.msra.mxu0 0.0
        %532 = vmatprep.subr.mxu0 0.0
        %533 = vmatpush1.msra.mxu0 0.0
        %534 = vmatprep.subr.mxu0 0.0
        %535 = vmatpush1.msra.mxu0 0.0
        %536 = vmatprep.subr.mxu0 0.0
        %537 = vmatpush1.msra.mxu0 0.0
        %538 = vmatprep.subr.mxu0 0.0
        %539 = vmatpush1.msra.mxu0 0.0
        %540 = vmatprep.subr.mxu0 0.0
        %541 = vmatpush1.msra.mxu0 0.0
        %542 = vmatprep.subr.mxu0 0.0
        %543 = vmatpush1.msra.mxu0 0.0
        %544 = vmatprep.subr.mxu0 0.0
        %545 = vmatpush1.msra.mxu0 0.0
        %546 = vmatprep.subr.mxu0 0.0
        %547 = vmatpush1.msra.mxu0 0.0
        %548 = vmatprep.subr.mxu0 0.0
        %549 = vmatpush1.msra.mxu0 0.0
        %550 = vmatprep.subr.mxu0 0.0
        %551 = vmatpush1.msra.mxu0 0.0
        %552 = vmatprep.subr.mxu0 0.0
        %553 = vmatpush1.msra.mxu0 0.0
        %554 = vmatprep.subr.mxu0 0.0
        %555 = vmatpush1.msra.mxu0 0.0
        %556 = vmatprep.subr.mxu0 0.0
        %557 = vmatpush1.msra.mxu0 0.0
        %558 = vmatprep.subr.mxu0 0.0
        %559 = vmatpush1.msra.mxu0 0.0
        %560 = vmatprep.mubr.f32.mxu0 0.0
        %v561 = vand.u32 %v284, 4294901760
        %v562 = vsub.f32 %v284, %v561
        %563 = vmatmul.mubr.f32.gmra.mrb[0].mxu0 %v562
        %v564 = vpop.f32.mrb[0].mxu0
        %v565 = vadd.f32 %v477, %v564
        %v566 = vpop.f32.mrb[0].mxu0
        %567 = vdwg.mxu0
        %568 = vmatprep.subr.mxu0 0.0
        %v569 = vand.u32 %v246, 4294901760
        %570 = vmatpush1.msra.mxu0 %v569
        %571 = vmatprep.subr.mxu0 0.0
        %v572 = vand.u32 %v247, 4294901760
        %573 = vmatpush1.msra.mxu0 %v572
        %574 = vmatprep.subr.mxu0 0.0
        %v575 = vand.u32 %v248, 4294901760
        %576 = vmatpush1.msra.mxu0 %v575
        %577 = vmatprep.subr.mxu0 0.0
        %v578 = vand.u32 %v249, 4294901760
        %579 = vmatpush1.msra.mxu0 %v578
        %580 = vmatprep.subr.mxu0 0.0
        %v581 = vand.u32 %v250, 4294901760
        %582 = vmatpush1.msra.mxu0 %v581
        %583 = vmatprep.subr.mxu0 0.0
        %v584 = vand.u32 %v251, 4294901760
        %585 = vmatpush1.msra.mxu0 %v584
        %586 = vmatprep.subr.mxu0 0.0
        %v587 = vand.u32 %v252, 4294901760
        %588 = vmatpush1.msra.mxu0 %v587
        %589 = vmatprep.subr.mxu0 0.0
        %v590 = vand.u32 %v253, 4294901760
        %591 = vmatpush1.msra.mxu0 %v590
        %592 = vmatprep.subr.mxu0 0.0
        %593 = vmatpush1.msra.mxu0 0.0
        %594 = vmatprep.subr.mxu0 0.0
        %595 = vmatpush1.msra.mxu0 0.0
        %596 = vmatprep.subr.mxu0 0.0
        %597 = vmatpush1.msra.mxu0 0.0
        %598 = vmatprep.subr.mxu0 0.0
        %599 = vmatpush1.msra.mxu0 0.0
        %600 = vmatprep.subr.mxu0 0.0
        %601 = vmatpush1.msra.mxu0 0.0
        %602 = vmatprep.subr.mxu0 0.0
        %603 = vmatpush1.msra.mxu0 0.0
        %604 = vmatprep.subr.mxu0 0.0
        %605 = vmatpush1.msra.mxu0 0.0
        %606 = vmatprep.subr.mxu0 0.0
        %607 = vmatpush1.msra.mxu0 0.0
        %608 = vmatprep.subr.mxu0 0.0
        %609 = vmatpush1.msra.mxu0 0.0
        %610 = vmatprep.subr.mxu0 0.0
        %611 = vmatpush1.msra.mxu0 0.0
        %612 = vmatprep.subr.mxu0 0.0
        %613 = vmatpush1.msra.mxu0 0.0
        %614 = vmatprep.subr.mxu0 0.0
        %615 = vmatpush1.msra.mxu0 0.0
        %616 = vmatprep.subr.mxu0 0.0
        %617 = vmatpush1.msra.mxu0 0.0
        %618 = vmatprep.subr.mxu0 0.0
        %619 = vmatpush1.msra.mxu0 0.0
        %620 = vmatprep.subr.mxu0 0.0
        %621 = vmatpush1.msra.mxu0 0.0
        %622 = vmatprep.subr.mxu0 0.0
        %623 = vmatpush1.msra.mxu0 0.0
        %624 = vmatprep.subr.mxu0 0.0
        %625 = vmatpush1.msra.mxu0 0.0
        %626 = vmatprep.subr.mxu0 0.0
        %627 = vmatpush1.msra.mxu0 0.0
        %628 = vmatprep.subr.mxu0 0.0
        %629 = vmatpush1.msra.mxu0 0.0
        %630 = vmatprep.subr.mxu0 0.0
        %631 = vmatpush1.msra.mxu0 0.0
        %632 = vmatprep.subr.mxu0 0.0
        %633 = vmatpush1.msra.mxu0 0.0
        %634 = vmatprep.subr.mxu0 0.0
        %635 = vmatpush1.msra.mxu0 0.0
        %636 = vmatprep.subr.mxu0 0.0
        %637 = vmatpush1.msra.mxu0 0.0
        %638 = vmatprep.subr.mxu0 0.0
        %639 = vmatpush1.msra.mxu0 0.0
        %640 = vmatprep.mubr.f32.mxu0 0.0
        %v641 = vand.u32 %v284, 4294901760
        %v642 = vsub.f32 %v284, %v641
        %v643 = vand.u32 %v642, 4294901760
        %644 = vmatmul.mubr.f32.gmra.mrb[0].mxu0 %v643
        %v645 = vpop.f32.mrb[0].mxu0
        %v646 = vadd.f32 %v565, %v645
        %v647 = vpop.f32.mrb[0].mxu0
        %648 = vdwg.mxu0
        %649 = vmatprep.subr.mxu0 0.0
        %v650 = vand.u32 %v246, 4294901760
        %v651 = vsub.f32 %v246, %v650
        %v652 = vand.u32 %v651, 4294901760
        %653 = vmatpush1.msra.mxu0 %v652
        %654 = vmatprep.subr.mxu0 0.0
        %v655 = vand.u32 %v247, 4294901760
        %v656 = vsub.f32 %v247, %v655
        %v657 = vand.u32 %v656, 4294901760
        %658 = vmatpush1.msra.mxu0 %v657
        %659 = vmatprep.subr.mxu0 0.0
        %v660 = vand.u32 %v248, 4294901760
        %v661 = vsub.f32 %v248, %v660
        %v662 = vand.u32 %v661, 4294901760
        %663 = vmatpush1.msra.mxu0 %v662
        %664 = vmatprep.subr.mxu0 0.0
        %v665 = vand.u32 %v249, 4294901760
        %v666 = vsub.f32 %v249, %v665
        %v667 = vand.u32 %v666, 4294901760
        %668 = vmatpush1.msra.mxu0 %v667
        %669 = vmatprep.subr.mxu0 0.0
        %v670 = vand.u32 %v250, 4294901760
        %v671 = vsub.f32 %v250, %v670
        %v672 = vand.u32 %v671, 4294901760
        %673 = vmatpush1.msra.mxu0 %v672
        %674 = vmatprep.subr.mxu0 0.0
        %v675 = vand.u32 %v251, 4294901760
        %v676 = vsub.f32 %v251, %v675
        %v677 = vand.u32 %v676, 4294901760
        %678 = vmatpush1.msra.mxu0 %v677
        %679 = vmatprep.subr.mxu0 0.0
        %v680 = vand.u32 %v252, 4294901760
        %v681 = vsub.f32 %v252, %v680
        %v682 = vand.u32 %v681, 4294901760
        %683 = vmatpush1.msra.mxu0 %v682
        %684 = vmatprep.subr.mxu0 0.0
        %v685 = vand.u32 %v253, 4294901760
        %v686 = vsub.f32 %v253, %v685
        %v687 = vand.u32 %v686, 4294901760
        %688 = vmatpush1.msra.mxu0 %v687
        %689 = vmatprep.subr.mxu0 0.0
        %690 = vmatpush1.msra.mxu0 0.0
        %691 = vmatprep.subr.mxu0 0.0
        %692 = vmatpush1.msra.mxu0 0.0
        %693 = vmatprep.subr.mxu0 0.0
        %694 = vmatpush1.msra.mxu0 0.0
        %695 = vmatprep.subr.mxu0 0.0
        %696 = vmatpush1.msra.mxu0 0.0
        %697 = vmatprep.subr.mxu0 0.0
        %698 = vmatpush1.msra.mxu0 0.0
        %699 = vmatprep.subr.mxu0 0.0
        %700 = vmatpush1.msra.mxu0 0.0
        %701 = vmatprep.subr.mxu0 0.0
        %702 = vmatpush1.msra.mxu0 0.0
        %703 = vmatprep.subr.mxu0 0.0
        %704 = vmatpush1.msra.mxu0 0.0
        %705 = vmatprep.subr.mxu0 0.0
        %706 = vmatpush1.msra.mxu0 0.0
        %707 = vmatprep.subr.mxu0 0.0
        %708 = vmatpush1.msra.mxu0 0.0
        %709 = vmatprep.subr.mxu0 0.0
        %710 = vmatpush1.msra.mxu0 0.0
        %711 = vmatprep.subr.mxu0 0.0
        %712 = vmatpush1.msra.mxu0 0.0
        %713 = vmatprep.subr.mxu0 0.0
        %714 = vmatpush1.msra.mxu0 0.0
        %715 = vmatprep.subr.mxu0 0.0
        %716 = vmatpush1.msra.mxu0 0.0
        %717 = vmatprep.subr.mxu0 0.0
        %718 = vmatpush1.msra.mxu0 0.0
        %719 = vmatprep.subr.mxu0 0.0
        %720 = vmatpush1.msra.mxu0 0.0
        %721 = vmatprep.subr.mxu0 0.0
        %722 = vmatpush1.msra.mxu0 0.0
        %723 = vmatprep.subr.mxu0 0.0
        %724 = vmatpush1.msra.mxu0 0.0
        %725 = vmatprep.subr.mxu0 0.0
        %726 = vmatpush1.msra.mxu0 0.0
        %727 = vmatprep.subr.mxu0 0.0
        %728 = vmatpush1.msra.mxu0 0.0
        %729 = vmatprep.subr.mxu0 0.0
        %730 = vmatpush1.msra.mxu0 0.0
        %731 = vmatprep.subr.mxu0 0.0
        %732 = vmatpush1.msra.mxu0 0.0
        %733 = vmatprep.subr.mxu0 0.0
        %734 = vmatpush1.msra.mxu0 0.0
        %735 = vmatprep.subr.mxu0 0.0
        %736 = vmatpush1.msra.mxu0 0.0
        %737 = vmatprep.mubr.f32.mxu0 0.0
        %v738 = vand.u32 %v284, 4294901760
        %739 = vmatmul.mubr.f32.gmra.mrb[0].mxu0 %v738
        %v740 = vpop.f32.mrb[0].mxu0
        %v741 = vadd.f32 %v646, %v740
        %v742 = vpop.f32.mrb[0].mxu0
        %743 = vdwg.mxu0
        %744 = vmatprep.subr.mxu0 0.0
        %v745 = vand.u32 %v246, 4294901760
        %746 = vmatpush1.msra.mxu0 %v745
        %747 = vmatprep.subr.mxu0 0.0
        %v748 = vand.u32 %v247, 4294901760
        %749 = vmatpush1.msra.mxu0 %v748
        %750 = vmatprep.subr.mxu0 0.0
        %v751 = vand.u32 %v248, 4294901760
        %752 = vmatpush1.msra.mxu0 %v751
        %753 = vmatprep.subr.mxu0 0.0
        %v754 = vand.u32 %v249, 4294901760
        %755 = vmatpush1.msra.mxu0 %v754
        %756 = vmatprep.subr.mxu0 0.0
        %v757 = vand.u32 %v250, 4294901760
        %758 = vmatpush1.msra.mxu0 %v757
        %759 = vmatprep.subr.mxu0 0.0
        %v760 = vand.u32 %v251, 4294901760
        %761 = vmatpush1.msra.mxu0 %v760
        %762 = vmatprep.subr.mxu0 0.0
        %v763 = vand.u32 %v252, 4294901760
        %764 = vmatpush1.msra.mxu0 %v763
        %765 = vmatprep.subr.mxu0 0.0
        %v766 = vand.u32 %v253, 4294901760
        %767 = vmatpush1.msra.mxu0 %v766
        %768 = vmatprep.subr.mxu0 0.0
        %769 = vmatpush1.msra.mxu0 0.0
        %770 = vmatprep.subr.mxu0 0.0
        %771 = vmatpush1.msra.mxu0 0.0
        %772 = vmatprep.subr.mxu0 0.0
        %773 = vmatpush1.msra.mxu0 0.0
        %774 = vmatprep.subr.mxu0 0.0
        %775 = vmatpush1.msra.mxu0 0.0
        %776 = vmatprep.subr.mxu0 0.0
        %777 = vmatpush1.msra.mxu0 0.0
        %778 = vmatprep.subr.mxu0 0.0
        %779 = vmatpush1.msra.mxu0 0.0
        %780 = vmatprep.subr.mxu0 0.0
        %781 = vmatpush1.msra.mxu0 0.0
        %782 = vmatprep.subr.mxu0 0.0
        %783 = vmatpush1.msra.mxu0 0.0
        %784 = vmatprep.subr.mxu0 0.0
        %785 = vmatpush1.msra.mxu0 0.0
        %786 = vmatprep.subr.mxu0 0.0
        %787 = vmatpush1.msra.mxu0 0.0
        %788 = vmatprep.subr.mxu0 0.0
        %789 = vmatpush1.msra.mxu0 0.0
        %790 = vmatprep.subr.mxu0 0.0
        %791 = vmatpush1.msra.mxu0 0.0
        %792 = vmatprep.subr.mxu0 0.0
        %793 = vmatpush1.msra.mxu0 0.0
        %794 = vmatprep.subr.mxu0 0.0
        %795 = vmatpush1.msra.mxu0 0.0
        %796 = vmatprep.subr.mxu0 0.0
        %797 = vmatpush1.msra.mxu0 0.0
        %798 = vmatprep.subr.mxu0 0.0
        %799 = vmatpush1.msra.mxu0 0.0
        %800 = vmatprep.subr.mxu0 0.0
        %801 = vmatpush1.msra.mxu0 0.0
        %802 = vmatprep.subr.mxu0 0.0
        %803 = vmatpush1.msra.mxu0 0.0
        %804 = vmatprep.subr.mxu0 0.0
        %805 = vmatpush1.msra.mxu0 0.0
        %806 = vmatprep.subr.mxu0 0.0
        %807 = vmatpush1.msra.mxu0 0.0
        %808 = vmatprep.subr.mxu0 0.0
        %809 = vmatpush1.msra.mxu0 0.0
        %810 = vmatprep.subr.mxu0 0.0
        %811 = vmatpush1.msra.mxu0 0.0
        %812 = vmatprep.subr.mxu0 0.0
        %813 = vmatpush1.msra.mxu0 0.0
        %814 = vmatprep.subr.mxu0 0.0
        %815 = vmatpush1.msra.mxu0 0.0
        %816 = vmatprep.mubr.f32.mxu0 0.0
        %v817 = vand.u32 %v284, 4294901760
        %818 = vmatmul.mubr.f32.gmra.mrb[0].mxu0 %v817
        %v819 = vpop.f32.mrb[0].mxu0
        %v820 = vadd.f32 %v741, %v819
        %v821 = vpop.f32.mrb[0].mxu0
        %822 = vdwg.mxu0
        %823 = vmatprep.subr.mxu0 0.0
        %v824 = vand.u32 %v274, 4294901760
        %825 = vmatpush1.msra.mxu0 %v824
        %826 = vmatprep.subr.mxu0 0.0
        %v827 = vand.u32 %v275, 4294901760
        %828 = vmatpush1.msra.mxu0 %v827
        %829 = vmatprep.subr.mxu0 0.0
        %v830 = vand.u32 %v276, 4294901760
        %831 = vmatpush1.msra.mxu0 %v830
        %832 = vmatprep.subr.mxu0 0.0
        %v833 = vand.u32 %v277, 4294901760
        %834 = vmatpush1.msra.mxu0 %v833
        %835 = vmatprep.subr.mxu0 0.0
        %v836 = vand.u32 %v278, 4294901760
        %837 = vmatpush1.msra.mxu0 %v836
        %838 = vmatprep.subr.mxu0 0.0
        %v839 = vand.u32 %v279, 4294901760
        %840 = vmatpush1.msra.mxu0 %v839
        %841 = vmatprep.subr.mxu0 0.0
        %v842 = vand.u32 %v280, 4294901760
        %843 = vmatpush1.msra.mxu0 %v842
        %844 = vmatprep.subr.mxu0 0.0
        %v845 = vand.u32 %v281, 4294901760
        %846 = vmatpush1.msra.mxu0 %v845
        %847 = vmatprep.subr.mxu0 0.0
        %848 = vmatpush1.msra.mxu0 0.0
        %849 = vmatprep.subr.mxu0 0.0
        %850 = vmatpush1.msra.mxu0 0.0
        %851 = vmatprep.subr.mxu0 0.0
        %852 = vmatpush1.msra.mxu0 0.0
        %853 = vmatprep.subr.mxu0 0.0
        %854 = vmatpush1.msra.mxu0 0.0
        %855 = vmatprep.subr.mxu0 0.0
        %856 = vmatpush1.msra.mxu0 0.0
        %857 = vmatprep.subr.mxu0 0.0
        %858 = vmatpush1.msra.mxu0 0.0
        %859 = vmatprep.subr.mxu0 0.0
        %860 = vmatpush1.msra.mxu0 0.0
        %861 = vmatprep.subr.mxu0 0.0
        %862 = vmatpush1.msra.mxu0 0.0
        %863 = vmatprep.subr.mxu0 0.0
        %864 = vmatpush1.msra.mxu0 0.0
        %865 = vmatprep.subr.mxu0 0.0
        %866 = vmatpush1.msra.mxu0 0.0
        %867 = vmatprep.subr.mxu0 0.0
        %868 = vmatpush1.msra.mxu0 0.0
        %869 = vmatprep.subr.mxu0 0.0
        %870 = vmatpush1.msra.mxu0 0.0
        %871 = vmatprep.subr.mxu0 0.0
        %872 = vmatpush1.msra.mxu0 0.0
        %873 = vmatprep.subr.mxu0 0.0
        %874 = vmatpush1.msra.mxu0 0.0
        %875 = vmatprep.subr.mxu0 0.0
        %876 = vmatpush1.msra.mxu0 0.0
        %877 = vmatprep.subr.mxu0 0.0
        %878 = vmatpush1.msra.mxu0 0.0
        %879 = vmatprep.subr.mxu0 0.0
        %880 = vmatpush1.msra.mxu0 0.0
        %881 = vmatprep.subr.mxu0 0.0
        %882 = vmatpush1.msra.mxu0 0.0
        %883 = vmatprep.subr.mxu0 0.0
        %884 = vmatpush1.msra.mxu0 0.0
        %885 = vmatprep.subr.mxu0 0.0
        %886 = vmatpush1.msra.mxu0 0.0
        %887 = vmatprep.subr.mxu0 0.0
        %888 = vmatpush1.msra.mxu0 0.0
        %889 = vmatprep.subr.mxu0 0.0
        %890 = vmatpush1.msra.mxu0 0.0
        %891 = vmatprep.subr.mxu0 0.0
        %892 = vmatpush1.msra.mxu0 0.0
        %893 = vmatprep.subr.mxu0 0.0
        %894 = vmatpush1.msra.mxu0 0.0
        %895 = vmatprep.mubr.f32.mxu0 0.0
        %v896 = vand.u32 %v284, 4294901760
        %v897 = vsub.f32 %v284, %v896
        %v898 = vand.u32 %v897, 4294901760
        %v899 = vsub.f32 %v897, %v898
        %v900 = vand.u32 %v899, 4294901760
        %901 = vmatmul.mubr.f32.gmra.mrb[0].mxu0 %v900
        %v902 = vpop.f32.mrb[0].mxu0
        %v903 = vadd.f32 0.0, %v902
        %v904 = vpop.f32.mrb[0].mxu0
        %905 = vdwg.mxu0
        %906 = vmatprep.subr.mxu0 0.0
        %v907 = vand.u32 %v274, 4294901760
        %v908 = vsub.f32 %v274, %v907
        %v909 = vand.u32 %v908, 4294901760
        %v910 = vsub.f32 %v908, %v909
        %v911 = vand.u32 %v910, 4294901760
        %912 = vmatpush1.msra.mxu0 %v911
        %913 = vmatprep.subr.mxu0 0.0
        %v914 = vand.u32 %v275, 4294901760
        %v915 = vsub.f32 %v275, %v914
        %v916 = vand.u32 %v915, 4294901760
        %v917 = vsub.f32 %v915, %v916
        %v918 = vand.u32 %v917, 4294901760
        %919 = vmatpush1.msra.mxu0 %v918
        %920 = vmatprep.subr.mxu0 0.0
        %v921 = vand.u32 %v276, 4294901760
        %v922 = vsub.f32 %v276, %v921
        %v923 = vand.u32 %v922, 4294901760
        %v924 = vsub.f32 %v922, %v923
        %v925 = vand.u32 %v924, 4294901760
        %926 = vmatpush1.msra.mxu0 %v925
        %927 = vmatprep.subr.mxu0 0.0
        %v928 = vand.u32 %v277, 4294901760
        %v929 = vsub.f32 %v277, %v928
        %v930 = vand.u32 %v929, 4294901760
        %v931 = vsub.f32 %v929, %v930
        %v932 = vand.u32 %v931, 4294901760
        %933 = vmatpush1.msra.mxu0 %v932
        %934 = vmatprep.subr.mxu0 0.0
        %v935 = vand.u32 %v278, 4294901760
        %v936 = vsub.f32 %v278, %v935
        %v937 = vand.u32 %v936, 4294901760
        %v938 = vsub.f32 %v936, %v937
        %v939 = vand.u32 %v938, 4294901760
        %940 = vmatpush1.msra.mxu0 %v939
        %941 = vmatprep.subr.mxu0 0.0
        %v942 = vand.u32 %v279, 4294901760
        %v943 = vsub.f32 %v279, %v942
        %v944 = vand.u32 %v943, 4294901760
        %v945 = vsub.f32 %v943, %v944
        %v946 = vand.u32 %v945, 4294901760
        %947 = vmatpush1.msra.mxu0 %v946
        %948 = vmatprep.subr.mxu0 0.0
        %v949 = vand.u32 %v280, 4294901760
        %v950 = vsub.f32 %v280, %v949
        %v951 = vand.u32 %v950, 4294901760
        %v952 = vsub.f32 %v950, %v951
        %v953 = vand.u32 %v952, 4294901760
        %954 = vmatpush1.msra.mxu0 %v953
        %955 = vmatprep.subr.mxu0 0.0
        %v956 = vand.u32 %v281, 4294901760
        %v957 = vsub.f32 %v281, %v956
        %v958 = vand.u32 %v957, 4294901760
        %v959 = vsub.f32 %v957, %v958
        %v960 = vand.u32 %v959, 4294901760
        %961 = vmatpush1.msra.mxu0 %v960
        %962 = vmatprep.subr.mxu0 0.0
        %963 = vmatpush1.msra.mxu0 0.0
        %964 = vmatprep.subr.mxu0 0.0
        %965 = vmatpush1.msra.mxu0 0.0
        %966 = vmatprep.subr.mxu0 0.0
        %967 = vmatpush1.msra.mxu0 0.0
        %968 = vmatprep.subr.mxu0 0.0
        %969 = vmatpush1.msra.mxu0 0.0
        %970 = vmatprep.subr.mxu0 0.0
        %971 = vmatpush1.msra.mxu0 0.0
        %972 = vmatprep.subr.mxu0 0.0
        %973 = vmatpush1.msra.mxu0 0.0
        %974 = vmatprep.subr.mxu0 0.0
        %975 = vmatpush1.msra.mxu0 0.0
        %976 = vmatprep.subr.mxu0 0.0
        %977 = vmatpush1.msra.mxu0 0.0
        %978 = vmatprep.subr.mxu0 0.0
        %979 = vmatpush1.msra.mxu0 0.0
        %980 = vmatprep.subr.mxu0 0.0
        %981 = vmatpush1.msra.mxu0 0.0
        %982 = vmatprep.subr.mxu0 0.0
        %983 = vmatpush1.msra.mxu0 0.0
        %984 = vmatprep.subr.mxu0 0.0
        %985 = vmatpush1.msra.mxu0 0.0
        %986 = vmatprep.subr.mxu0 0.0
        %987 = vmatpush1.msra.mxu0 0.0
        %988 = vmatprep.subr.mxu0 0.0
        %989 = vmatpush1.msra.mxu0 0.0
        %990 = vmatprep.subr.mxu0 0.0
        %991 = vmatpush1.msra.mxu0 0.0
        %992 = vmatprep.subr.mxu0 0.0
        %993 = vmatpush1.msra.mxu0 0.0
        %994 = vmatprep.subr.mxu0 0.0
        %995 = vmatpush1.msra.mxu0 0.0
        %996 = vmatprep.subr.mxu0 0.0
        %997 = vmatpush1.msra.mxu0 0.0
        %998 = vmatprep.subr.mxu0 0.0
        %999 = vmatpush1.msra.mxu0 0.0
        %1000 = vmatprep.subr.mxu0 0.0
        %1001 = vmatpush1.msra.mxu0 0.0
        %1002 = vmatprep.subr.mxu0 0.0
        %1003 = vmatpush1.msra.mxu0 0.0
        %1004 = vmatprep.subr.mxu0 0.0
        %1005 = vmatpush1.msra.mxu0 0.0
        %1006 = vmatprep.subr.mxu0 0.0
        %1007 = vmatpush1.msra.mxu0 0.0
        %1008 = vmatprep.subr.mxu0 0.0
        %1009 = vmatpush1.msra.mxu0 0.0
        %1010 = vmatprep.mubr.f32.mxu0 0.0
        %v1011 = vand.u32 %v284, 4294901760
        %1012 = vmatmul.mubr.f32.gmra.mrb[0].mxu0 %v1011
        %v1013 = vpop.f32.mrb[0].mxu0
        %v1014 = vadd.f32 %v903, %v1013
        %v1015 = vpop.f32.mrb[0].mxu0
        %1016 = vdwg.mxu0
        %1017 = vmatprep.subr.mxu0 0.0
        %v1018 = vand.u32 %v274, 4294901760
        %v1019 = vsub.f32 %v274, %v1018
        %1020 = vmatpush1.msra.mxu0 %v1019
        %1021 = vmatprep.subr.mxu0 0.0
        %v1022 = vand.u32 %v275, 4294901760
        %v1023 = vsub.f32 %v275, %v1022
        %1024 = vmatpush1.msra.mxu0 %v1023
        %1025 = vmatprep.subr.mxu0 0.0
        %v1026 = vand.u32 %v276, 4294901760
        %v1027 = vsub.f32 %v276, %v1026
        %1028 = vmatpush1.msra.mxu0 %v1027
        %1029 = vmatprep.subr.mxu0 0.0
        %v1030 = vand.u32 %v277, 4294901760
        %v1031 = vsub.f32 %v277, %v1030
        %1032 = vmatpush1.msra.mxu0 %v1031
        %1033 = vmatprep.subr.mxu0 0.0
        %v1034 = vand.u32 %v278, 4294901760
        %v1035 = vsub.f32 %v278, %v1034
        %1036 = vmatpush1.msra.mxu0 %v1035
        %1037 = vmatprep.subr.mxu0 0.0
        %v1038 = vand.u32 %v279, 4294901760
        %v1039 = vsub.f32 %v279, %v1038
        %1040 = vmatpush1.msra.mxu0 %v1039
        %1041 = vmatprep.subr.mxu0 0.0
        %v1042 = vand.u32 %v280, 4294901760
        %v1043 = vsub.f32 %v280, %v1042
        %1044 = vmatpush1.msra.mxu0 %v1043
        %1045 = vmatprep.subr.mxu0 0.0
        %v1046 = vand.u32 %v281, 4294901760
        %v1047 = vsub.f32 %v281, %v1046
        %1048 = vmatpush1.msra.mxu0 %v1047
        %1049 = vmatprep.subr.mxu0 0.0
        %1050 = vmatpush1.msra.mxu0 0.0
        %1051 = vmatprep.subr.mxu0 0.0
        %1052 = vmatpush1.msra.mxu0 0.0
        %1053 = vmatprep.subr.mxu0 0.0
        %1054 = vmatpush1.msra.mxu0 0.0
        %1055 = vmatprep.subr.mxu0 0.0
        %1056 = vmatpush1.msra.mxu0 0.0
        %1057 = vmatprep.subr.mxu0 0.0
        %1058 = vmatpush1.msra.mxu0 0.0
        %1059 = vmatprep.subr.mxu0 0.0
        %1060 = vmatpush1.msra.mxu0 0.0
        %1061 = vmatprep.subr.mxu0 0.0
        %1062 = vmatpush1.msra.mxu0 0.0
        %1063 = vmatprep.subr.mxu0 0.0
        %1064 = vmatpush1.msra.mxu0 0.0
        %1065 = vmatprep.subr.mxu0 0.0
        %1066 = vmatpush1.msra.mxu0 0.0
        %1067 = vmatprep.subr.mxu0 0.0
        %1068 = vmatpush1.msra.mxu0 0.0
        %1069 = vmatprep.subr.mxu0 0.0
        %1070 = vmatpush1.msra.mxu0 0.0
        %1071 = vmatprep.subr.mxu0 0.0
        %1072 = vmatpush1.msra.mxu0 0.0
        %1073 = vmatprep.subr.mxu0 0.0
        %1074 = vmatpush1.msra.mxu0 0.0
        %1075 = vmatprep.subr.mxu0 0.0
        %1076 = vmatpush1.msra.mxu0 0.0
        %1077 = vmatprep.subr.mxu0 0.0
        %1078 = vmatpush1.msra.mxu0 0.0
        %1079 = vmatprep.subr.mxu0 0.0
        %1080 = vmatpush1.msra.mxu0 0.0
        %1081 = vmatprep.subr.mxu0 0.0
        %1082 = vmatpush1.msra.mxu0 0.0
        %1083 = vmatprep.subr.mxu0 0.0
        %1084 = vmatpush1.msra.mxu0 0.0
        %1085 = vmatprep.subr.mxu0 0.0
        %1086 = vmatpush1.msra.mxu0 0.0
        %1087 = vmatprep.subr.mxu0 0.0
        %1088 = vmatpush1.msra.mxu0 0.0
        %1089 = vmatprep.subr.mxu0 0.0
        %1090 = vmatpush1.msra.mxu0 0.0
        %1091 = vmatprep.subr.mxu0 0.0
        %1092 = vmatpush1.msra.mxu0 0.0
        %1093 = vmatprep.subr.mxu0 0.0
        %1094 = vmatpush1.msra.mxu0 0.0
        %1095 = vmatprep.subr.mxu0 0.0
        %1096 = vmatpush1.msra.mxu0 0.0
        %1097 = vmatprep.mubr.f32.mxu0 0.0
        %v1098 = vand.u32 %v284, 4294901760
        %v1099 = vsub.f32 %v284, %v1098
        %1100 = vmatmul.mubr.f32.gmra.mrb[0].mxu0 %v1099
        %v1101 = vpop.f32.mrb[0].mxu0
        %v1102 = vadd.f32 %v1014, %v1101
        %v1103 = vpop.f32.mrb[0].mxu0
        %1104 = vdwg.mxu0
        %1105 = vmatprep.subr.mxu0 0.0
        %v1106 = vand.u32 %v274, 4294901760
        %1107 = vmatpush1.msra.mxu0 %v1106
        %1108 = vmatprep.subr.mxu0 0.0
        %v1109 = vand.u32 %v275, 4294901760
        %1110 = vmatpush1.msra.mxu0 %v1109
        %1111 = vmatprep.subr.mxu0 0.0
        %v1112 = vand.u32 %v276, 4294901760
        %1113 = vmatpush1.msra.mxu0 %v1112
        %1114 = vmatprep.subr.mxu0 0.0
        %v1115 = vand.u32 %v277, 4294901760
        %1116 = vmatpush1.msra.mxu0 %v1115
        %1117 = vmatprep.subr.mxu0 0.0
        %v1118 = vand.u32 %v278, 4294901760
        %1119 = vmatpush1.msra.mxu0 %v1118
        %1120 = vmatprep.subr.mxu0 0.0
        %v1121 = vand.u32 %v279, 4294901760
        %1122 = vmatpush1.msra.mxu0 %v1121
        %1123 = vmatprep.subr.mxu0 0.0
        %v1124 = vand.u32 %v280, 4294901760
        %1125 = vmatpush1.msra.mxu0 %v1124
        %1126 = vmatprep.subr.mxu0 0.0
        %v1127 = vand.u32 %v281, 4294901760
        %1128 = vmatpush1.msra.mxu0 %v1127
        %1129 = vmatprep.subr.mxu0 0.0
        %1130 = vmatpush1.msra.mxu0 0.0
        %1131 = vmatprep.subr.mxu0 0.0
        %1132 = vmatpush1.msra.mxu0 0.0
        %1133 = vmatprep.subr.mxu0 0.0
        %1134 = vmatpush1.msra.mxu0 0.0
        %1135 = vmatprep.subr.mxu0 0.0
        %1136 = vmatpush1.msra.mxu0 0.0
        %1137 = vmatprep.subr.mxu0 0.0
        %1138 = vmatpush1.msra.mxu0 0.0
        %1139 = vmatprep.subr.mxu0 0.0
        %1140 = vmatpush1.msra.mxu0 0.0
        %1141 = vmatprep.subr.mxu0 0.0
        %1142 = vmatpush1.msra.mxu0 0.0
        %1143 = vmatprep.subr.mxu0 0.0
        %1144 = vmatpush1.msra.mxu0 0.0
        %1145 = vmatprep.subr.mxu0 0.0
        %1146 = vmatpush1.msra.mxu0 0.0
        %1147 = vmatprep.subr.mxu0 0.0
        %1148 = vmatpush1.msra.mxu0 0.0
        %1149 = vmatprep.subr.mxu0 0.0
        %1150 = vmatpush1.msra.mxu0 0.0
        %1151 = vmatprep.subr.mxu0 0.0
        %1152 = vmatpush1.msra.mxu0 0.0
        %1153 = vmatprep.subr.mxu0 0.0
        %1154 = vmatpush1.msra.mxu0 0.0
        %1155 = vmatprep.subr.mxu0 0.0
        %1156 = vmatpush1.msra.mxu0 0.0
        %1157 = vmatprep.subr.mxu0 0.0
        %1158 = vmatpush1.msra.mxu0 0.0
        %1159 = vmatprep.subr.mxu0 0.0
        %1160 = vmatpush1.msra.mxu0 0.0
        %1161 = vmatprep.subr.mxu0 0.0
        %1162 = vmatpush1.msra.mxu0 0.0
        %1163 = vmatprep.subr.mxu0 0.0
        %1164 = vmatpush1.msra.mxu0 0.0
        %1165 = vmatprep.subr.mxu0 0.0
        %1166 = vmatpush1.msra.mxu0 0.0
        %1167 = vmatprep.subr.mxu0 0.0
        %1168 = vmatpush1.msra.mxu0 0.0
        %1169 = vmatprep.subr.mxu0 0.0
        %1170 = vmatpush1.msra.mxu0 0.0
        %1171 = vmatprep.subr.mxu0 0.0
        %1172 = vmatpush1.msra.mxu0 0.0
        %1173 = vmatprep.subr.mxu0 0.0
        %1174 = vmatpush1.msra.mxu0 0.0
        %1175 = vmatprep.subr.mxu0 0.0
        %1176 = vmatpush1.msra.mxu0 0.0
        %1177 = vmatprep.mubr.f32.mxu0 0.0
        %v1178 = vand.u32 %v284, 4294901760
        %v1179 = vsub.f32 %v284, %v1178
        %v1180 = vand.u32 %v1179, 4294901760
        %1181 = vmatmul.mubr.f32.gmra.mrb[0].mxu0 %v1180
        %v1182 = vpop.f32.mrb[0].mxu0
        %v1183 = vadd.f32 %v1102, %v1182
        %v1184 = vpop.f32.mrb[0].mxu0
        %1185 = vdwg.mxu0
        %1186 = vmatprep.subr.mxu0 0.0
        %v1187 = vand.u32 %v274, 4294901760
        %v1188 = vsub.f32 %v274, %v1187
        %v1189 = vand.u32 %v1188, 4294901760
        %1190 = vmatpush1.msra.mxu0 %v1189
        %1191 = vmatprep.subr.mxu0 0.0
        %v1192 = vand.u32 %v275, 4294901760
        %v1193 = vsub.f32 %v275, %v1192
        %v1194 = vand.u32 %v1193, 4294901760
        %1195 = vmatpush1.msra.mxu0 %v1194
        %1196 = vmatprep.subr.mxu0 0.0
        %v1197 = vand.u32 %v276, 4294901760
        %v1198 = vsub.f32 %v276, %v1197
        %v1199 = vand.u32 %v1198, 4294901760
        %1200 = vmatpush1.msra.mxu0 %v1199
        %1201 = vmatprep.subr.mxu0 0.0
        %v1202 = vand.u32 %v277, 4294901760
        %v1203 = vsub.f32 %v277, %v1202
        %v1204 = vand.u32 %v1203, 4294901760
        %1205 = vmatpush1.msra.mxu0 %v1204
        %1206 = vmatprep.subr.mxu0 0.0
        %v1207 = vand.u32 %v278, 4294901760
        %v1208 = vsub.f32 %v278, %v1207
        %v1209 = vand.u32 %v1208, 4294901760
        %1210 = vmatpush1.msra.mxu0 %v1209
        %1211 = vmatprep.subr.mxu0 0.0
        %v1212 = vand.u32 %v279, 4294901760
        %v1213 = vsub.f32 %v279, %v1212
        %v1214 = vand.u32 %v1213, 4294901760
        %1215 = vmatpush1.msra.mxu0 %v1214
        %1216 = vmatprep.subr.mxu0 0.0
        %v1217 = vand.u32 %v280, 4294901760
        %v1218 = vsub.f32 %v280, %v1217
        %v1219 = vand.u32 %v1218, 4294901760
        %1220 = vmatpush1.msra.mxu0 %v1219
        %1221 = vmatprep.subr.mxu0 0.0
        %v1222 = vand.u32 %v281, 4294901760
        %v1223 = vsub.f32 %v281, %v1222
        %v1224 = vand.u32 %v1223, 4294901760
        %1225 = vmatpush1.msra.mxu0 %v1224
        %1226 = vmatprep.subr.mxu0 0.0
        %1227 = vmatpush1.msra.mxu0 0.0
        %1228 = vmatprep.subr.mxu0 0.0
        %1229 = vmatpush1.msra.mxu0 0.0
        %1230 = vmatprep.subr.mxu0 0.0
        %1231 = vmatpush1.msra.mxu0 0.0
        %1232 = vmatprep.subr.mxu0 0.0
        %1233 = vmatpush1.msra.mxu0 0.0
        %1234 = vmatprep.subr.mxu0 0.0
        %1235 = vmatpush1.msra.mxu0 0.0
        %1236 = vmatprep.subr.mxu0 0.0
        %1237 = vmatpush1.msra.mxu0 0.0
        %1238 = vmatprep.subr.mxu0 0.0
        %1239 = vmatpush1.msra.mxu0 0.0
        %1240 = vmatprep.subr.mxu0 0.0
        %1241 = vmatpush1.msra.mxu0 0.0
        %1242 = vmatprep.subr.mxu0 0.0
        %1243 = vmatpush1.msra.mxu0 0.0
        %1244 = vmatprep.subr.mxu0 0.0
        %1245 = vmatpush1.msra.mxu0 0.0
        %1246 = vmatprep.subr.mxu0 0.0
        %1247 = vmatpush1.msra.mxu0 0.0
        %1248 = vmatprep.subr.mxu0 0.0
        %1249 = vmatpush1.msra.mxu0 0.0
        %1250 = vmatprep.subr.mxu0 0.0
        %1251 = vmatpush1.msra.mxu0 0.0
        %1252 = vmatprep.subr.mxu0 0.0
        %1253 = vmatpush1.msra.mxu0 0.0
        %1254 = vmatprep.subr.mxu0 0.0
        %1255 = vmatpush1.msra.mxu0 0.0
        %1256 = vmatprep.subr.mxu0 0.0
        %1257 = vmatpush1.msra.mxu0 0.0
        %1258 = vmatprep.subr.mxu0 0.0
        %1259 = vmatpush1.msra.mxu0 0.0
        %1260 = vmatprep.subr.mxu0 0.0
        %1261 = vmatpush1.msra.mxu0 0.0
        %1262 = vmatprep.subr.mxu0 0.0
        %1263 = vmatpush1.msra.mxu0 0.0
        %1264 = vmatprep.subr.mxu0 0.0
        %1265 = vmatpush1.msra.mxu0 0.0
        %1266 = vmatprep.subr.mxu0 0.0
        %1267 = vmatpush1.msra.mxu0 0.0
        %1268 = vmatprep.subr.mxu0 0.0
        %1269 = vmatpush1.msra.mxu0 0.0
        %1270 = vmatprep.subr.mxu0 0.0
        %1271 = vmatpush1.msra.mxu0 0.0
        %1272 = vmatprep.subr.mxu0 0.0
        %1273 = vmatpush1.msra.mxu0 0.0
        %1274 = vmatprep.mubr.f32.mxu0 0.0
        %v1275 = vand.u32 %v284, 4294901760
        %1276 = vmatmul.mubr.f32.gmra.mrb[0].mxu0 %v1275
        %v1277 = vpop.f32.mrb[0].mxu0
        %v1278 = vadd.f32 %v1183, %v1277
        %v1279 = vpop.f32.mrb[0].mxu0
        %1280 = vdwg.mxu0
        %1281 = vmatprep.subr.mxu0 0.0
        %v1282 = vand.u32 %v274, 4294901760
        %1283 = vmatpush1.msra.mxu0 %v1282
        %1284 = vmatprep.subr.mxu0 0.0
        %v1285 = vand.u32 %v275, 4294901760
        %1286 = vmatpush1.msra.mxu0 %v1285
        %1287 = vmatprep.subr.mxu0 0.0
        %v1288 = vand.u32 %v276, 4294901760
        %1289 = vmatpush1.msra.mxu0 %v1288
        %1290 = vmatprep.subr.mxu0 0.0
        %v1291 = vand.u32 %v277, 4294901760
        %1292 = vmatpush1.msra.mxu0 %v1291
        %1293 = vmatprep.subr.mxu0 0.0
        %v1294 = vand.u32 %v278, 4294901760
        %1295 = vmatpush1.msra.mxu0 %v1294
        %1296 = vmatprep.subr.mxu0 0.0
        %v1297 = vand.u32 %v279, 4294901760
        %1298 = vmatpush1.msra.mxu0 %v1297
        %1299 = vmatprep.subr.mxu0 0.0
        %v1300 = vand.u32 %v280, 4294901760
        %1301 = vmatpush1.msra.mxu0 %v1300
        %1302 = vmatprep.subr.mxu0 0.0
        %v1303 = vand.u32 %v281, 4294901760
        %1304 = vmatpush1.msra.mxu0 %v1303
        %1305 = vmatprep.subr.mxu0 0.0
        %1306 = vmatpush1.msra.mxu0 0.0
        %1307 = vmatprep.subr.mxu0 0.0
        %1308 = vmatpush1.msra.mxu0 0.0
        %1309 = vmatprep.subr.mxu0 0.0
        %1310 = vmatpush1.msra.mxu0 0.0
        %1311 = vmatprep.subr.mxu0 0.0
        %1312 = vmatpush1.msra.mxu0 0.0
        %1313 = vmatprep.subr.mxu0 0.0
        %1314 = vmatpush1.msra.mxu0 0.0
        %1315 = vmatprep.subr.mxu0 0.0
        %1316 = vmatpush1.msra.mxu0 0.0
        %1317 = vmatprep.subr.mxu0 0.0
        %1318 = vmatpush1.msra.mxu0 0.0
        %1319 = vmatprep.subr.mxu0 0.0
        %1320 = vmatpush1.msra.mxu0 0.0
        %1321 = vmatprep.subr.mxu0 0.0
        %1322 = vmatpush1.msra.mxu0 0.0
        %1323 = vmatprep.subr.mxu0 0.0
        %1324 = vmatpush1.msra.mxu0 0.0
        %1325 = vmatprep.subr.mxu0 0.0
        %1326 = vmatpush1.msra.mxu0 0.0
        %1327 = vmatprep.subr.mxu0 0.0
        %1328 = vmatpush1.msra.mxu0 0.0
        %1329 = vmatprep.subr.mxu0 0.0
        %1330 = vmatpush1.msra.mxu0 0.0
        %1331 = vmatprep.subr.mxu0 0.0
        %1332 = vmatpush1.msra.mxu0 0.0
        %1333 = vmatprep.subr.mxu0 0.0
        %1334 = vmatpush1.msra.mxu0 0.0
        %1335 = vmatprep.subr.mxu0 0.0
        %1336 = vmatpush1.msra.mxu0 0.0
        %1337 = vmatprep.subr.mxu0 0.0
        %1338 = vmatpush1.msra.mxu0 0.0
        %1339 = vmatprep.subr.mxu0 0.0
        %1340 = vmatpush1.msra.mxu0 0.0
        %1341 = vmatprep.subr.mxu0 0.0
        %1342 = vmatpush1.msra.mxu0 0.0
        %1343 = vmatprep.subr.mxu0 0.0
        %1344 = vmatpush1.msra.mxu0 0.0
        %1345 = vmatprep.subr.mxu0 0.0
        %1346 = vmatpush1.msra.mxu0 0.0
        %1347 = vmatprep.subr.mxu0 0.0
        %1348 = vmatpush1.msra.mxu0 0.0
        %1349 = vmatprep.subr.mxu0 0.0
        %1350 = vmatpush1.msra.mxu0 0.0
        %1351 = vmatprep.subr.mxu0 0.0
        %1352 = vmatpush1.msra.mxu0 0.0
        %1353 = vmatprep.mubr.f32.mxu0 0.0
        %v1354 = vand.u32 %v284, 4294901760
        %1355 = vmatmul.mubr.f32.gmra.mrb[0].mxu0 %v1354
        %v1356 = vpop.f32.mrb[0].mxu0
        %v1357 = vadd.f32 %v1278, %v1356
        %v1358 = vpop.f32.mrb[0].mxu0
        %1359 = vdwg.mxu0
        %v1360 = vld [vmem:[%s213] sm:$0x1]
        %v1361 = vld [vmem:[%s213 + $0x1] sm:$0x1]
        %v1362 = vld [vmem:[%s213 + $0x2] sm:$0x1]
        %v1363 = vld [vmem:[%s213 + $0x3] sm:$0x1]
        %v1364 = vlaneseq
        %v1365 = vshrl.u32 %v1364, 7
        %v1366 = vsub.s32 0, %v1365
        %v1367 = vrot.slane %v1363, %v1366
        %v1368 = vmul.f32 %v1367, %v1357
        %v1369 = vlaneseq
        %v1370 = vshrl.u32 %v1369, 7
        %v1371 = vsub.s32 0, %v1370
        %v1372 = vrot.slane %v1361, %v1371
        %v1373 = vadd.f32 %v1372, %v1368
        %v1374 = vmul.f32 %v820, %v1373
        %v1375 = vlaneseq
        %v1376 = vshrl.u32 %v1375, 7
        %v1377 = vsub.s32 0, %v1376
        %v1378 = vrot.slane %v1360, %v1377
        %v1379 = vadd.f32 %v1378, %v1374
        %v1380 = vlaneseq
        %v1381 = vshrl.u32 %v1380, 7
        %v1382 = vsub.s32 0, %v1381
        %v1383 = vrot.slane %v1362, %v1382
        %v1384 = vmul.f32 %v1383, %v1357
        %v1385 = vadd.f32 %v1379, %v1384
        %1386 = vst [vmem:[%s201] sm:$0xff] %v1385
        %s1387 = sand.u32 %s117, 1
        %s1388 = scalar_lea.sflag [#allocation3], %s1387
        %s1389 = sand.u32 %s117, 1
        %s1390 = smul.addr %s1389, 8
        %s1391 = scalar_lea.vmem [#allocation2], %s1390
        // Predicated region
        $region33: #{logic_layer_forward.1} parent=31 // pred_check
          %p1392 = pneg %p127
        $region34: #{logic_layer_forward.1} parent=31 // pred_check_branch
          %1394 = sbr.rel (%p1392) target = $region36
        $region35: #{logic_layer_forward.1} parent=31 // pred_region
          %s1396 = ssub.s32 128, 128
          %1397 = vsyncadd %s1388, %s1396
          %s1398 = smul.addr %s21, 2
          %s1399 = sadd.s32 %s22, %s1398
          %s1400 = smul.addr %s1399, 128
          %s1401 = scalar_lea.hbm %s3, %s1400
          %s1403 = sshll.u32 %s1391, 4
          %s1404 = int_to_ptr.vmem [resolvable:$true] %s1403
          %1406 = dma.vmem_to_hbm [thread:$0]  %s1404, 128, %s1401, %s1388
        $region36: #{logic_layer_forward.1} parent=31 // pred_fallthru
          _
      $region32: #{logic_layer_forward.1} parent=5 // pred_fallthru
        _
      %p1407 = scmp.le.s32.totalorder 2, %s12
      // Predicated region
      $region37: #{logic_layer_forward.1} parent=5 // pred_check
        %p1408 = pneg %p1407
      $region38: #{logic_layer_forward.1} parent=5 // pred_check_branch
        %1410 = sbr.rel (%p1408) target = $region40
      $region39: #{logic_layer_forward.1} parent=5 // pred_region
        %s1411 = ssub.s32 %s12, 2
        // Predicated region
        $region41: #{logic_layer_forward.1} parent=39 // pred_check
          %p1412 = pneg %p133
        $region42: #{logic_layer_forward.1} parent=39 // pred_check_branch
          %1414 = sbr.rel (%p1412) target = $region44
        $region43: #{logic_layer_forward.1} parent=39 // pred_region
          %s1415 = sand.u32 %s118, 1
          %s1416 = scalar_lea.sflag [#allocation3], %s1415
          %s1417 = sand.u32 %s118, 1
          %s1418 = smul.addr %s1417, 8
          %s1419 = scalar_lea.vmem [#allocation2], %s1418
          %1420 = dma.done %s1416, 128
        $region44: #{logic_layer_forward.1} parent=39 // pred_fallthru
          _
      $region40: #{logic_layer_forward.1} parent=5 // pred_fallthru
        _
    $region6: #{logic_layer_forward.1} parent=1 // loop_footer
      %s16 = sadd.s32 1, %s12
    $region7: #{logic_layer_forward.1} parent=1 // loop_footer_branch
      %11 = sbr.rel target = $region3
    $region8: #{logic_layer_forward.1} parent=1 // loop_exit
      _
    %1421 = vsyncpa [#allocation3], 1
    %s1422 = scalar_lea.sflag [#allocation3], 1
    %1423 = vsyncpa %s1422, 1

</llo_original>
